<compile_context>
chip_gen: v7x
topology: tpu7x:2x2x1
jax: 0.10.0
libtpu: 0.0.40
codegen_flags: <defaults>
</compile_context>

<pallas_src>
import functools
import math

import jax
import jax.numpy as jnp
from jax.experimental import pallas as pl
from jax.experimental.pallas import tpu as pltpu


def _round_up(a, b):
    return ((a + b - 1) // b) * b


def _soft_hist_kernel(x_ref, o_ref, *, sigma, delta, vmin, bins_pad, tn, chunk):
    k = pl.program_id(1)

    @pl.when(k == 0)
    def _():
        o_ref[...] = jnp.zeros_like(o_ref)

    # centers along the sublane axis, computed in-kernel.
    rows = jax.lax.broadcasted_iota(jnp.int32, (bins_pad, 1), 0).astype(jnp.float32)
    sc = sigma * (vmin + delta * (rows + 0.5))           # sigma*centers, (bins_pad, 1)
    sx = sigma * x_ref[...]                              # sigma*x,       (1, tn)

    h = 0.5 * sigma * delta
    two_sinh_h = 2.0 * math.sinh(h)
    two_cosh_h = 2.0 * math.cosh(h)

    part = jnp.zeros((bins_pad, 128), jnp.float32)
    for j0 in range(0, tn, chunk):
        u = sc - sx[:, j0:j0 + chunk]                    # (bins_pad, chunk)
        # Keep exp/recip finite for sentinel padding / far tails; the window is
        # ~1e-25 out there, so the clip does not change the result.
        u = jnp.clip(u, -60.0, 60.0)
        e = jnp.exp(u)
        einv = pl.reciprocal(e, approx=True)             # e^-u (error damped in denom)
        w = two_sinh_h / (two_cosh_h + e + einv)         # == sigmoid(u+h) - sigmoid(u-h)
        # Lane-dense fold: chunk lanes -> 128 lanes (pure VALU adds, no XLU).
        for c0 in range(0, chunk, 128):
            part = part + w[:, c0:c0 + 128]

    o_ref[...] += part


def soft_histogram(x, *, bins, vmin, vmax, sigma, tn=None, n_splits=2):
    """Pallas soft histogram. x is flattened to (N,); returns (bins,) float32."""
    x = x.reshape(-1).astype(jnp.float32)
    n = x.shape[0]

    delta = float(vmax - vmin) / float(bins)
    if n == 0:
        return jnp.zeros((bins,), jnp.float32)

    bins_pad = _round_up(bins, 8)

    # Lane tile: large enough to amortize per-step overhead, multiple of the
    # 512-lane inner chunk, capped at 8192.
    chunk = 512
    per_split = -(-n // n_splits)
    if tn is None:
        tn = max(chunk, min(8192, _round_up(per_split, chunk)))
    else:
        tn = max(chunk, _round_up(int(tn), chunk))
    steps = -(-n // (n_splits * tn))
    n_pad = n_splits * steps * tn

    # Sentinel padding: guaranteed |sigma*(center - sentinel)| >= 64 for every
    # (padded) center, so the window is numerically zero; finite in f32.
    sentinel = float(vmax) + 8.0 * delta + 64.0 / float(sigma)
    xf = jnp.full((n_pad,), sentinel, dtype=jnp.float32).at[:n].set(x)
    x3d = xf.reshape(n_splits, 1, steps * tn)

    kernel = functools.partial(
        _soft_hist_kernel,
        sigma=float(sigma), delta=delta, vmin=float(vmin),
        bins_pad=bins_pad, tn=tn, chunk=chunk,
    )

    out = pl.pallas_call(
        kernel,
        out_shape=jax.ShapeDtypeStruct((n_splits, bins_pad, 128), jnp.float32),
        grid_spec=pltpu.PrefetchScalarGridSpec(
            num_scalar_prefetch=0,
            grid=(n_splits, steps),
            in_specs=[
                pl.BlockSpec((None, 1, tn), lambda p, k: (p, 0, k)),
            ],
            out_specs=pl.BlockSpec((None, bins_pad, 128), lambda p, k: (p, 0, 0)),
        ),
        compiler_params=pltpu.CompilerParams(
            dimension_semantics=("parallel", "arbitrary"),
        ),
    )(x3d)

    # Final cross-lane / cross-split fold + slice off padded bins (tiny XLA op).
    return out.sum(axis=(0, 2))[:bins]


def soft_histogram_ref(x, *, bins, vmin, vmax, sigma):
    """Pure-JAX reference mirroring the PyTorch forward."""
    x = x.reshape(-1).astype(jnp.float32)
    delta = float(vmax - vmin) / float(bins)
    centers = (float(vmin) + delta * (jnp.arange(bins, dtype=jnp.float32) + 0.5)
               ).reshape(bins, 1)
    x_ = x.reshape(1, -1)
    x1 = centers - x_
    x2 = jax.nn.sigmoid(sigma * (x1 + delta / 2)) - jax.nn.sigmoid(sigma * (x1 - delta / 2))
    return x2.sum(axis=1)


if __name__ == "__main__":
    bins = 16
    vmin, vmax = 0.0, 1.0
    sigma = 75.0
    N = 1000  # deliberately not a multiple of the lane tile to exercise padding

    key = jax.random.PRNGKey(0)
    x = jax.random.uniform(key, (N,), dtype=jnp.float32, minval=vmin, maxval=vmax)

    out = soft_histogram(x, bins=bins, vmin=vmin, vmax=vmax, sigma=sigma)
    out = jax.block_until_ready(out)

    ref = soft_histogram_ref(x, bins=bins, vmin=vmin, vmax=vmax, sigma=sigma)
    assert out.shape == (bins,)
    assert jnp.allclose(out, ref, atol=1e-2, rtol=1e-3), (out, ref)

    print("KERNEL_OK")
</pallas_src>

<mosaic_0001>
module attributes {stable_mosaic.version = 11 : i64} {
  func.func @_soft_hist_kernel(%arg0: i32, %arg1: i32, %arg2: memref<1x1x512xf32, #tpu.memory_space<vmem>>, %arg3: memref<1x16x128xf32, #tpu.memory_space<vmem>>) attributes {dimension_semantics = [#tpu.dimension_semantics<parallel>, #tpu.dimension_semantics<arbitrary>], iteration_bounds = array<i64: 2, 1>, scalar_prefetch = 0 : i64, scratch_operands = 0 : i64, tpu.core_type = #tpu.core_type<tc>, window_params = [{transform_indices = @transform_0, window_bounds = array<i64: 1, 1, 512>}, {transform_indices = @transform_1, window_bounds = array<i64: 1, 16, 128>}]} {
    %c0_i32 = arith.constant 0 : i32
    %0 = arith.cmpi eq, %arg1, %c0_i32 : i32
    %1 = arith.extui %0 : i1 to i32
    %c0_i32_0 = arith.constant 0 : i32
    %2 = arith.cmpi ne, %1, %c0_i32_0 : i32
    scf.if %2 {
      %cst_18 = arith.constant 0.000000e+00 : f32
      %46 = vector.broadcast %cst_18 : f32 to vector<16x128xf32>
      %c0_19 = arith.constant 0 : index
      %c0_20 = arith.constant 0 : index
      %c0_21 = arith.constant 0 : index
      %47 = vector.load %arg3[%c0_19, %c0_20, %c0_21] : memref<1x16x128xf32, #tpu.memory_space<vmem>>, vector<1x16x128xf32>
      %48 = vector.shape_cast %47 : vector<1x16x128xf32> to vector<16x128xf32>
      %49 = vector.shape_cast %46 : vector<16x128xf32> to vector<1x16x128xf32>
      tpu.vector_store %arg3[%c0_19, %c0_20, %c0_21], %49 {strides = array<i32>} : memref<1x16x128xf32, #tpu.memory_space<vmem>>, vector<1x16x128xf32>,
    } else {
    }
    %3 = tpu.iota {dimensions = array<i32: 0>} : vector<16x1xi32>
    %4 = arith.sitofp %3 : vector<16x1xi32> to vector<16x1xf32>
    %cst = arith.constant 5.000000e-01 : f32
    %5 = vector.broadcast %cst : f32 to vector<16x1xf32>
    %6 = arith.addf %4, %5 : vector<16x1xf32>
    %cst_1 = arith.constant 6.250000e-02 : f32
    %7 = vector.broadcast %cst_1 : f32 to vector<16x1xf32>
    %8 = arith.mulf %7, %6 : vector<16x1xf32>
    %cst_2 = arith.constant 0.000000e+00 : f32
    %9 = vector.broadcast %cst_2 : f32 to vector<16x1xf32>
    %10 = arith.addf %9, %8 : vector<16x1xf32>
    %cst_3 = arith.constant 7.500000e+01 : f32
    %11 = vector.broadcast %cst_3 : f32 to vector<16x1xf32>
    %12 = arith.mulf %11, %10 : vector<16x1xf32>
    %c0 = arith.constant 0 : index
    %c0_4 = arith.constant 0 : index
    %c0_5 = arith.constant 0 : index
    %13 = vector.load %arg2[%c0, %c0_4, %c0_5] : memref<1x1x512xf32, #tpu.memory_space<vmem>>, vector<1x1x512xf32>
    %14 = vector.shape_cast %13 : vector<1x1x512xf32> to vector<1x512xf32>
    %cst_6 = arith.constant 7.500000e+01 : f32
    %15 = vector.broadcast %cst_6 : f32 to vector<1x512xf32>
    %16 = arith.mulf %15, %14 : vector<1x512xf32>
    %cst_7 = arith.constant 0.000000e+00 : f32
    %17 = vector.broadcast %cst_7 : f32 to vector<16x128xf32>
    %18 = vector.broadcast %12 : vector<16x1xf32> to vector<16x512xf32>
    %19 = vector.broadcast %16 : vector<1x512xf32> to vector<16x512xf32>
    %20 = arith.subf %18, %19 : vector<16x512xf32>
    %cst_8 = arith.constant -6.000000e+01 : f32
    %cst_9 = arith.constant 6.000000e+01 : f32
    %21 = vector.broadcast %cst_8 : f32 to vector<16x512xf32>
    %22 = arith.maximumf %21, %20 : vector<16x512xf32>
    %23 = vector.broadcast %cst_9 : f32 to vector<16x512xf32>
    %24 = arith.minimumf %23, %22 : vector<16x512xf32>
    %25 = math.exp %24 : vector<16x512xf32>
    %26 = tpu.reciprocal %25 {approx = true} : vector<16x512xf32> -> vector<16x512xf32>
    %cst_10 = arith.constant 10.5162067 : f32
    %27 = vector.broadcast %cst_10 : f32 to vector<16x512xf32>
    %28 = arith.addf %27, %25 : vector<16x512xf32>
    %29 = arith.addf %28, %26 : vector<16x512xf32>
    %cst_11 = arith.constant 10.3242722 : f32
    %30 = vector.broadcast %cst_11 : f32 to vector<16x512xf32>
    %31 = arith.divf %30, %29 : vector<16x512xf32>
    %32 = vector.extract_strided_slice %31 {offsets = [0, 0], sizes = [16, 128], strides = [1, 1]} : vector<16x512xf32> to vector<16x128xf32>
    %33 = arith.addf %17, %32 : vector<16x128xf32>
    %34 = vector.extract_strided_slice %31 {offsets = [0, 128], sizes = [16, 128], strides = [1, 1]} : vector<16x512xf32> to vector<16x128xf32>
    %35 = arith.addf %33, %34 : vector<16x128xf32>
    %36 = vector.extract_strided_slice %31 {offsets = [0, 256], sizes = [16, 128], strides = [1, 1]} : vector<16x512xf32> to vector<16x128xf32>
    %37 = arith.addf %35, %36 : vector<16x128xf32>
    %38 = vector.extract_strided_slice %31 {offsets = [0, 384], sizes = [16, 128], strides = [1, 1]} : vector<16x512xf32> to vector<16x128xf32>
    %39 = arith.addf %37, %38 : vector<16x128xf32>
    %c0_12 = arith.constant 0 : index
    %c0_13 = arith.constant 0 : index
    %c0_14 = arith.constant 0 : index
    %40 = vector.load %arg3[%c0_12, %c0_13, %c0_14] : memref<1x16x128xf32, #tpu.memory_space<vmem>>, vector<1x16x128xf32>
    %41 = vector.shape_cast %40 : vector<1x16x128xf32> to vector<16x128xf32>
    %42 = arith.addf %41, %39 : vector<16x128xf32>
    %c0_15 = arith.constant 0 : index
    %c0_16 = arith.constant 0 : index
    %c0_17 = arith.constant 0 : index
    %43 = vector.load %arg3[%c0_15, %c0_16, %c0_17] : memref<1x16x128xf32, #tpu.memory_space<vmem>>, vector<1x16x128xf32>
    %44 = vector.shape_cast %43 : vector<1x16x128xf32> to vector<16x128xf32>
    %45 = vector.shape_cast %42 : vector<16x128xf32> to vector<1x16x128xf32>
    tpu.vector_store %arg3[%c0_15, %c0_16, %c0_17], %45 {strides = array<i32>} : memref<1x16x128xf32, #tpu.memory_space<vmem>>, vector<1x16x128xf32>,
    return
  }
  func.func @transform_0(%arg0: i32, %arg1: i32) -> (i32, i32, i32) {
    %c0_i32 = arith.constant 0 : i32
    %c0_i32_0 = arith.constant 0 : i32
    return %arg0, %c0_i32, %arg1 : i32, i32, i32
  }
  func.func @transform_1(%arg0: i32, %arg1: i32) -> (i32, i32, i32) {
    %c0_i32 = arith.constant 0 : i32
    %c0_i32_0 = arith.constant 0 : i32
    %c0_i32_1 = arith.constant 0 : i32
    return %arg0, %c0_i32, %c0_i32_0 : i32, i32, i32
  }
}

</mosaic_0001>

<llo_original>
// kernel: tpu_custom_call.1
$region0: #{tpu_custom_call.1}
  #allocation0 [shape = 'u32[]', space=smem, size = 0x4, offset = 0x4, fixed_abs, tag = 'smem constant byte address 0x4 - core index']
  #allocation1 [shape = 'u32[144,128]{1,0:T(1,128)}', space=vmem, size = 0x12000, scoped, tag = 'internal scratch']
  %s0 = inlined_call_operand.hbm [shape: f32[2,1,512], index: 0, kind: input, shape index: {}]
  %s1 = inlined_call_operand.hbm [shape: f32[2,16,128], index: 1, kind: output, shape index: {}]
  %s2 = sld [smem:[#allocation0]]
  $region45: #{tpu_custom_call.1} parent=0
    _
  %s4 = ssub.s32 1, %s2
  %s5 = scalar_select 0, %s4, %s2
  $region1: #{tpu_custom_call.1} parent=0
    #allocation2 [shape = 'u8[4096]{0}', space=vmem, size = 0x1000, scoped, tag = 'input window, operand 0']
    #allocation3 [shape = 's32[2]{0}', space=sflag, size = 0x8, scoped, tag = 'scoped memory for tpu_custom_call.1']
    #allocation4 [shape = 's32[2]{0}', space=sflag, size = 0x8, scoped, tag = 'scoped memory for tpu_custom_call.1']
    #allocation5 [shape = 'u8[16384]{0}', space=vmem, size = 0x4000, scoped, tag = 'output window, operand 0']
    %6 = vsyncpa [#allocation3], 0
    %s7 = scalar_lea.sflag [#allocation3], 1
    %8 = vsyncpa %s7, 0
    %9 = vsyncpa [#allocation4], 0
    %s10 = scalar_lea.sflag [#allocation4], 1
    %11 = vsyncpa %s10, 0
    loop: start=0, step=1, limit=4
    $region2: #{tpu_custom_call.1} parent=1 // loop_pre_header
      _
    $region3: #{tpu_custom_call.1} parent=1 // loop_header
      %s13 = sphi 0, %s17
      %p14 = scmp.ge.s32.totalorder %s13, 4
      %s20 = sphi 0, %s32
      %s21 = sphi 0, %s28
      %s22 = sphi 0, %s20
      %s23 = sphi 0, %s21
      %s24 = sphi 0, %s22
      %s25 = sphi 0, %s23
      %s37 = sphi 0, %s39
      %s40 = sphi 0, %s37
      %s41 = sphi 0, %s40
      %s57 = sphi 0, %s41
      %s63 = sphi 0, %s65
      %s66 = sphi 0, %s63
      %s67 = sphi 0, %s66
      %s83 = sphi 0, %s67
    $region4: #{tpu_custom_call.1} parent=1 // loop_header_branch
      %16 = sbr.rel (%p14) target = $region8
    $region5: #{tpu_custom_call.1} parent=1 // loop_body
      %s18 = ssub.s32 %s13, 1
      %s19 = ssub.s32 %s13, 2
      %s26 = sadd.s32 1, %s21
      %p27 = scmp.ge.s32.totalorder %s26, 1
      %s28 = scalar_select %p27, 0, %s26
      %s29 = sadd.s32 1, %s20
      %s30 = scalar_select %p27, %s29, %s20
      %p31 = scmp.ge.s32.totalorder %s30, 2
      %s32 = scalar_select %p31, 0, %s30
      %s33 = ssub.s32 %s20, %s32
      %s34 = ssub.s32 %s21, %s28
      %s35 = sor.u32 %s33, %s34
      %p36 = scmp.eq.s32.totalorder %s35, 0
      %s38 = sadd.s32 %s37, 1
      %s39 = scalar_select %p36, %s37, %s38
      %p42 = pneg %p36
      %p43 = scmp.eq.s32.totalorder %s13, 1
      %p44 = por %p42, %p43
      %p45 = scmp.ne.s32.totalorder %s37, %s40
      %p46 = scmp.eq.s32.totalorder %s13, 0
      %p47 = por %p45, %p46
      %p48 = scmp.ne.s32.totalorder %s37, %s40
      %p49 = scmp.eq.s32.totalorder %s18, 1
      %p50 = por %p48, %p49
      %p51 = scmp.ne.s32.totalorder %s40, %s41
      %p52 = scmp.eq.s32.totalorder %s18, 0
      %p53 = por %p51, %p52
      %p54 = scmp.ne.s32.totalorder %s40, %s41
      %p55 = scmp.eq.s32.totalorder %s19, 1
      %p56 = por %p54, %p55
      %p58 = scmp.ne.s32.totalorder %s41, %s57
      %p59 = scmp.eq.s32.totalorder %s19, 0
      %p60 = por %p58, %p59
      %s61 = ssub.s32 %s20, %s32
      %p62 = scmp.eq.s32.totalorder %s61, 0
      %s64 = sadd.s32 %s63, 1
      %s65 = scalar_select %p62, %s63, %s64
      %p68 = pneg %p62
      %p69 = scmp.eq.s32.totalorder %s13, 1
      %p70 = por %p68, %p69
      %p71 = scmp.ne.s32.totalorder %s63, %s66
      %p72 = scmp.eq.s32.totalorder %s13, 0
      %p73 = por %p71, %p72
      %p74 = scmp.ne.s32.totalorder %s63, %s66
      %p75 = scmp.eq.s32.totalorder %s18, 1
      %p76 = por %p74, %p75
      %p77 = scmp.ne.s32.totalorder %s66, %s67
      %p78 = scmp.eq.s32.totalorder %s18, 0
      %p79 = por %p77, %p78
      %p80 = scmp.ne.s32.totalorder %s66, %s67
      %p81 = scmp.eq.s32.totalorder %s19, 1
      %p82 = por %p80, %p81
      %p84 = scmp.ne.s32.totalorder %s67, %s83
      %p85 = scmp.eq.s32.totalorder %s19, 0
      %p86 = por %p84, %p85
      %p87 = scmp.le.s32.totalorder 1, %s13
      %p88 = scmp.lt.s32.totalorder %s13, 3
      %p89 = pnand %p87, %p88
      %p90 = pneg %p89
      // Predicated region
      $region9: #{tpu_custom_call.1} parent=5 // pred_check
        _
      $region10: #{tpu_custom_call.1} parent=5 // pred_check_branch
        %92 = sbr.rel (%p89) target = $region12
      $region11: #{tpu_custom_call.1} parent=5 // pred_region
        %s93 = ssub.s32 %s13, 1
      $region12: #{tpu_custom_call.1} parent=5 // pred_fallthru
        _
      %p94 = scmp.lt.s32.totalorder %s13, 2
      // Predicated region
      $region13: #{tpu_custom_call.1} parent=5 // pred_check
        %p95 = pneg %p94
      $region14: #{tpu_custom_call.1} parent=5 // pred_check_branch
        %97 = sbr.rel (%p95) target = $region16
      $region15: #{tpu_custom_call.1} parent=5 // pred_region
        // Predicated region
        $region17: #{tpu_custom_call.1} parent=15 // pred_check
          %p98 = pneg %p47
        $region18: #{tpu_custom_call.1} parent=15 // pred_check_branch
          %100 = sbr.rel (%p98) target = $region20
        $region19: #{tpu_custom_call.1} parent=15 // pred_region
          %s101 = sand.u32 %s37, 1
          %s102 = scalar_lea.sflag [#allocation3], %s101
          %s103 = sand.u32 %s37, 1
          %s104 = smul.addr %s103, 4
          %s105 = scalar_lea.vmem [#allocation2], %s104
          %s106 = smul.u32 4, %s21
          %s108 = ssub.s32 64, 64
          %109 = vsyncadd %s102, %s108
          %s110 = smul.addr %s20, 4
          %s111 = sadd.s32 %s106, %s110
          %s112 = smul.addr %s111, 16
          %s113 = scalar_lea.hbm %s0, %s112
          %s115 = sshll.u32 %s105, 4
          %s116 = int_to_ptr.vmem [resolvable:$true] %s115
          %118 = dma.hbm_to_vmem [thread:$0]  %s113, 64, %s116, %s102
        $region20: #{tpu_custom_call.1} parent=15 // pred_fallthru
          _
      $region16: #{tpu_custom_call.1} parent=5 // pred_fallthru
        _
      %p119 = scmp.le.s32.totalorder 1, %s13
      %p120 = scmp.lt.s32.totalorder %s13, 3
      %p121 = pnand %p119, %p120
      %p122 = pneg %p121
      // Predicated region
      $region21: #{tpu_custom_call.1} parent=5 // pred_check
        _
      $region22: #{tpu_custom_call.1} parent=5 // pred_check_branch
        %124 = sbr.rel (%p121) target = $region24
      $region23: #{tpu_custom_call.1} parent=5 // pred_region
        %s125 = ssub.s32 %s13, 1
        %s126 = sand.u32 %s40, 1
        %s127 = scalar_lea.sflag [#allocation3], %s126
        %s128 = sand.u32 %s40, 1
        %s129 = smul.addr %s128, 4
        %s130 = scalar_lea.vmem [#allocation2], %s129
        // Predicated region
        $region25: #{tpu_custom_call.1} parent=23 // pred_check
          %p131 = pneg %p53
        $region26: #{tpu_custom_call.1} parent=23 // pred_check_branch
          %133 = sbr.rel (%p131) target = $region28
        $region27: #{tpu_custom_call.1} parent=23 // pred_region
          %134 = dma.done %s127, 64
        $region28: #{tpu_custom_call.1} parent=23 // pred_fallthru
          _
        %s135 = sand.u32 %s40, 1
        %s136 = scalar_lea.sflag [#allocation3], %s135
        %s137 = sand.u32 %s40, 1
        %s138 = smul.addr %s137, 4
        %s139 = scalar_lea.vmem [#allocation2], %s138
        %p140 = pneg %p53
        %p141 = pneg %p50
        %p142 = pneg %p79
        %p143 = pneg %p76
        %s144 = sand.u32 %s66, 1
        %s145 = scalar_lea.sflag [#allocation4], %s144
        %s146 = sand.u32 %s66, 1
        %s147 = smul.addr %s146, 16
        %s148 = scalar_lea.vmem [#allocation5], %s147
        %s149 = smul.u32 4, %s23
        %p150 = scmp.eq.s32.totalorder %s23, 0
        // Predicated region
        $region29: #{tpu_custom_call.1} parent=23 // pred_check
          %p151 = pneg %p150
        $region30: #{tpu_custom_call.1} parent=23 // pred_check_branch
          %153 = sbr.rel (%p151) target = $region32
        $region31: #{tpu_custom_call.1} parent=23 // pred_region
          %154 = vst [vmem:[%s148] sm:$0xff] 0.0
          %155 = vst [vmem:[%s148 + $0x8] sm:$0xff] 0.0
        $region32: #{tpu_custom_call.1} parent=23 // pred_fallthru
          _
        %v156 = vlaneseq
        %v157 = vshrl.u32 %v156, 7
        %v158 = vadd.s32 %v157, 8
        %v159 = vcvt.s32.f32 %v157
        %v160 = vcvt.s32.f32 %v158
        %v161 = vadd.f32 %v159, 0.5
        %v162 = vadd.f32 %v160, 0.5
        %v163 = vmul.f32 %v161, 0.0625
        %v164 = vmul.f32 %v162, 0.0625
        %v165 = vadd.f32 %v163, 0.0
        %v166 = vadd.f32 %v164, 0.0
        %v167 = vmul.f32 %v165, 75.0
        %v168 = vmul.f32 %v166, 75.0
        %v169 = vld [vmem:[%s130] sm:$0xf]
        %v170 = vmul.f32 %v169, 75.0
        %v172 = vlaneseq
        %v173 = vshrl.u32 %v172, 7
        %v174 = vsub.s32 0, %v173
        %v175 = vrot.slane %v170, %v174
        %v176 = vlaneseq
        %v177 = vshrl.u32 %v176, 7
        %v178 = vsub.s32 1, %v177
        %v179 = vrot.slane %v170, %v178
        %v180 = vlaneseq
        %v181 = vshrl.u32 %v180, 7
        %v182 = vsub.s32 2, %v181
        %v183 = vrot.slane %v170, %v182
        %v184 = vlaneseq
        %v185 = vshrl.u32 %v184, 7
        %v186 = vsub.s32 3, %v185
        %v187 = vrot.slane %v170, %v186
        %v192 = vsub.f32 %v167, %v175
        %v193 = vsub.f32 %v167, %v179
        %v194 = vsub.f32 %v167, %v183
        %v195 = vsub.f32 %v167, %v187
        %v196 = vsub.f32 %v168, %v175
        %v197 = vsub.f32 %v168, %v179
        %v198 = vsub.f32 %v168, %v183
        %v199 = vsub.f32 %v168, %v187
        %v200 = vmax.f32 %v192, -60.0
        %v201 = vmax.f32 %v193, -60.0
        %v202 = vmax.f32 %v194, -60.0
        %v203 = vmax.f32 %v195, -60.0
        %v204 = vmax.f32 %v196, -60.0
        %v205 = vmax.f32 %v197, -60.0
        %v206 = vmax.f32 %v198, -60.0
        %v207 = vmax.f32 %v199, -60.0
        %v208 = vmin.f32 %v200, 60.0
        %v209 = vmin.f32 %v201, 60.0
        %v210 = vmin.f32 %v202, 60.0
        %v211 = vmin.f32 %v203, 60.0
        %v212 = vmin.f32 %v204, 60.0
        %v213 = vmin.f32 %v205, 60.0
        %v214 = vmin.f32 %v206, 60.0
        %v215 = vmin.f32 %v207, 60.0
        %v216 = vmul.f32 %v208, 1.442695
        %v217 = vpow.pop %v216
        %v218 = vmul.f32 %v209, 1.442695
        %v219 = vpow.pop %v218
        %v220 = vmul.f32 %v210, 1.442695
        %v221 = vpow.pop %v220
        %v222 = vmul.f32 %v211, 1.442695
        %v223 = vpow.pop %v222
        %v224 = vmul.f32 %v212, 1.442695
        %v225 = vpow.pop %v224
        %v226 = vmul.f32 %v213, 1.442695
        %v227 = vpow.pop %v226
        %v228 = vmul.f32 %v214, 1.442695
        %v229 = vpow.pop %v228
        %v230 = vmul.f32 %v215, 1.442695
        %v231 = vpow.pop %v230
        %v232 = vrcp.pop %v217
        %v233 = vrcp.pop %v219
        %v234 = vrcp.pop %v221
        %v235 = vrcp.pop %v223
        %v236 = vrcp.pop %v225
        %v237 = vrcp.pop %v227
        %v238 = vrcp.pop %v229
        %v239 = vrcp.pop %v231
        %v240 = vadd.f32 %v217, 10.516207
        %v241 = vadd.f32 %v219, 10.516207
        %v242 = vadd.f32 %v221, 10.516207
        %v243 = vadd.f32 %v223, 10.516207
        %v244 = vadd.f32 %v225, 10.516207
        %v245 = vadd.f32 %v227, 10.516207
        %v246 = vadd.f32 %v229, 10.516207
        %v247 = vadd.f32 %v231, 10.516207
        %v248 = vadd.f32 %v240, %v232
        %v249 = vadd.f32 %v241, %v233
        %v250 = vadd.f32 %v242, %v234
        %v251 = vadd.f32 %v243, %v235
        %v252 = vadd.f32 %v244, %v236
        %v253 = vadd.f32 %v245, %v237
        %v254 = vadd.f32 %v246, %v238
        %v255 = vadd.f32 %v247, %v239
        %v256 = vrcp.pop %v248
        %v257 = vmul.f32 10.324272, %v256
        %v258 = vrcp.pop %v249
        %v259 = vmul.f32 10.324272, %v258
        %v260 = vrcp.pop %v250
        %v261 = vmul.f32 10.324272, %v260
        %v262 = vrcp.pop %v251
        %v263 = vmul.f32 10.324272, %v262
        %v264 = vrcp.pop %v252
        %v265 = vmul.f32 10.324272, %v264
        %v266 = vrcp.pop %v253
        %v267 = vmul.f32 10.324272, %v266
        %v268 = vrcp.pop %v254
        %v269 = vmul.f32 10.324272, %v268
        %v270 = vrcp.pop %v255
        %v271 = vmul.f32 10.324272, %v270
        %v272 = vadd.f32 %v257, 0.0
        %v273 = vadd.f32 %v265, 0.0
        %v274 = vadd.f32 %v272, %v259
        %v275 = vadd.f32 %v273, %v267
        %v276 = vadd.f32 %v274, %v261
        %v277 = vadd.f32 %v275, %v269
        %v278 = vadd.f32 %v276, %v263
        %v279 = vadd.f32 %v277, %v271
        %v280 = vld [vmem:[%s148] sm:$0xff]
        %v281 = vld [vmem:[%s148 + $0x8] sm:$0xff]
        %v282 = vadd.f32 %v280, %v278
        %v283 = vadd.f32 %v281, %v279
        %284 = vst [vmem:[%s148] sm:$0xff] %v282
        %285 = vst [vmem:[%s148 + $0x8] sm:$0xff] %v283
        %s286 = sand.u32 %s66, 1
        %s287 = scalar_lea.sflag [#allocation4], %s286
        %s288 = sand.u32 %s66, 1
        %s289 = smul.addr %s288, 16
        %s290 = scalar_lea.vmem [#allocation5], %s289
        // Predicated region
        $region33: #{tpu_custom_call.1} parent=23 // pred_check
          %p291 = pneg %p76
        $region34: #{tpu_custom_call.1} parent=23 // pred_check_branch
          %293 = sbr.rel (%p291) target = $region36
        $region35: #{tpu_custom_call.1} parent=23 // pred_region
          %s295 = ssub.s32 256, 256
          %296 = vsyncadd %s287, %s295
          %s297 = smul.addr %s22, 2
          %s298 = smul.addr %s297, 128
          %s299 = scalar_lea.hbm %s1, %s298
          %s300 = sshll.u32 %s290, 4
          %s301 = int_to_ptr.vmem [resolvable:$true] %s300
          %306 = dma.vmem_to_hbm [thread:$0]  %s301, 256, %s299, %s287, 128, 128, 8
        $region36: #{tpu_custom_call.1} parent=23 // pred_fallthru
          _
      $region24: #{tpu_custom_call.1} parent=5 // pred_fallthru
        _
      %p307 = scmp.le.s32.totalorder 2, %s13
      // Predicated region
      $region37: #{tpu_custom_call.1} parent=5 // pred_check
        %p308 = pneg %p307
      $region38: #{tpu_custom_call.1} parent=5 // pred_check_branch
        %310 = sbr.rel (%p308) target = $region40
      $region39: #{tpu_custom_call.1} parent=5 // pred_region
        %s311 = ssub.s32 %s13, 2
        // Predicated region
        $region41: #{tpu_custom_call.1} parent=39 // pred_check
          %p312 = pneg %p82
        $region42: #{tpu_custom_call.1} parent=39 // pred_check_branch
          %314 = sbr.rel (%p312) target = $region44
        $region43: #{tpu_custom_call.1} parent=39 // pred_region
          %s315 = sand.u32 %s67, 1
          %s316 = scalar_lea.sflag [#allocation4], %s315
          %s317 = sand.u32 %s67, 1
          %s318 = smul.addr %s317, 16
          %s319 = scalar_lea.vmem [#allocation5], %s318
          %320 = dma.done %s316, 256
        $region44: #{tpu_custom_call.1} parent=39 // pred_fallthru
          _
      $region40: #{tpu_custom_call.1} parent=5 // pred_fallthru
        _
    $region6: #{tpu_custom_call.1} parent=1 // loop_footer
      %s17 = sadd.s32 1, %s13
    $region7: #{tpu_custom_call.1} parent=1 // loop_footer_branch
      %12 = sbr.rel target = $region3
    $region8: #{tpu_custom_call.1} parent=1 // loop_exit
      _
    %321 = vsyncpa [#allocation3], 1
    %s322 = scalar_lea.sflag [#allocation3], 1
    %323 = vsyncpa %s322, 1
    %324 = vsyncpa [#allocation4], 1
    %s325 = scalar_lea.sflag [#allocation4], 1
    %326 = vsyncpa %s325, 1

</llo_original>
